<compile_context>
chip_gen: v7x
topology: tpu7x:2x2x1
jax: 0.10.0
libtpu: 0.0.40
codegen_flags: <defaults>
</compile_context>

<pallas_src>
import jax
import jax.numpy as jnp
from jax.experimental import pallas as pl
from jax.experimental.pallas import tpu as pltpu

KERNEL_SIZE = 5
PAD = (KERNEL_SIZE - 1) // 2          # 2
_INV_K2 = 1.0 / (KERNEL_SIZE * KERNEL_SIZE)


def _filter_high_kernel(x_ref, o_ref, xpad_ref):
    # x_ref:    (TC, H, W)              block of image planes (N*C batched)
    # o_ref:    (TC, H, W)
    # xpad_ref: (TC, H+4, W+4) VMEM     halo scratch (zero border, image center)
    TC, H, W = x_ref.shape
    Hp = H + 2 * PAD
    Wp = W + 2 * PAD
    f32 = jnp.float32

    # Zero the halo border every step.  (Scratch persists across grid steps and
    # the "parallel" grid may be split across TensorCores, so a one-time init
    # gated on program_id==0 would be unsafe.)  These are 4 tiny strip stores.
    xpad_ref[:, 0:PAD, :] = jnp.zeros((TC, PAD, Wp), f32)
    xpad_ref[:, PAD + H:Hp, :] = jnp.zeros((TC, PAD, Wp), f32)
    xpad_ref[:, :, 0:PAD] = jnp.zeros((TC, Hp, PAD), f32)
    xpad_ref[:, :, PAD + W:Wp] = jnp.zeros((TC, Hp, PAD), f32)

    # Place the image planes in the center of the halo buffer.
    x = x_ref[...].astype(f32)
    xpad_ref[:, PAD:PAD + H, PAD:PAD + W] = x

    xp = xpad_ref[...]                                   # (TC, Hp, Wp)

    # Separable 5x5 box sum: 4 horizontal (lane) + 4 vertical (sublane) adds,
    # tree-shaped to shorten the dependency chain.
    h01 = xp[:, :, 0:W] + xp[:, :, 1:1 + W]
    h23 = xp[:, :, 2:2 + W] + xp[:, :, 3:3 + W]
    hs = (h01 + h23) + xp[:, :, 4:4 + W]                 # (TC, Hp, W)

    v01 = hs[:, 0:H, :] + hs[:, 1:1 + H, :]
    v23 = hs[:, 2:2 + H, :] + hs[:, 3:3 + H, :]
    box = (v01 + v23) + hs[:, 4:4 + H, :]                # (TC, H, W)

    # count_include_pad=True with zero padding -> divisor is always 25.
    low = box * _INV_K2
    o_ref[...] = (0.5 + 0.5 * (x - low)).astype(o_ref.dtype)


def _pick_block_channels(nc, h, w,
                         target_block_bytes=1 << 20,     # ~1 MiB blocks
                         vmem_budget_bytes=24 << 20):    # safe under v7x 32 MiB scoped
    """Channels-per-block so each block is ~1 MiB and VMEM stays bounded."""
    plane = h * w * 4
    pad_plane = (h + 2 * PAD) * (w + 2 * PAD) * 4
    per_chan = 4 * plane + pad_plane  # dbl-buffered in + out, plus halo scratch
    tc = min(nc,
             max(1, target_block_bytes // max(plane, 1)),
             max(1, vmem_budget_bytes // max(per_chan, 1)))
    if nc >= 2:
        # keep at least 2 grid steps so a "parallel" axis can feed both v7x cores
        tc = min(tc, pl.cdiv(nc, 2))
    return max(1, tc)


def filter_high(img):
    """img: (N, C, H, W) float32 -> (N, C, H, W) float32."""
    N, C, H, W = img.shape
    NC = N * C
    x = img.reshape(NC, H, W)

    TC = _pick_block_channels(NC, H, W)
    grid = (pl.cdiv(NC, TC),)
    # TODO(synk): for very large planes (e.g. 2048x2048 f32 = 16 MiB) TC=1 still
    # overflows v7x's 64 MiB VMEM; add H-strip tiling with a 2-row halo there.

    out = pl.pallas_call(
        _filter_high_kernel,
        out_shape=jax.ShapeDtypeStruct((NC, H, W), img.dtype),
        grid_spec=pltpu.PrefetchScalarGridSpec(
            num_scalar_prefetch=0,
            grid=grid,
            in_specs=[pl.BlockSpec((TC, H, W), lambda i: (i, 0, 0))],
            out_specs=pl.BlockSpec((TC, H, W), lambda i: (i, 0, 0)),
            scratch_shapes=[
                pltpu.VMEM((TC, H + 2 * PAD, W + 2 * PAD), jnp.float32)],
        ),
        compiler_params=pltpu.CompilerParams(
            dimension_semantics=("parallel",)),
    )(x)
    return out.reshape(N, C, H, W)


def _filter_high_ref(img):
    """Pure-JAX reference (matches PyTorch AvgPool2d count_include_pad=True)."""
    N, C, H, W = img.shape
    x = img.reshape(N * C, 1, H, W).astype(jnp.float32)
    w = jnp.full((1, 1, KERNEL_SIZE, KERNEL_SIZE), _INV_K2, jnp.float32)
    low = jax.lax.conv_general_dilated(
        x, w, window_strides=(1, 1), padding=[(PAD, PAD), (PAD, PAD)],
        dimension_numbers=("NCHW", "OIHW", "NCHW"))
    low = low.reshape(N, C, H, W)
    return (0.5 + (img - low) * 0.5).astype(img.dtype)


if __name__ == "__main__":
    key = jax.random.PRNGKey(0)
    img = jax.random.uniform(key, (2, 4, 16, 16), dtype=jnp.float32)

    out = filter_high(img)
    out = jax.block_until_ready(out)

    ref = _filter_high_ref(img)
    assert out.shape == (2, 4, 16, 16)
    assert jnp.allclose(out, ref, atol=1e-5, rtol=1e-5)
    print("KERNEL_OK")
</pallas_src>

<mosaic_0001>
module attributes {stable_mosaic.version = 11 : i64} {
  func.func @_filter_high_kernel(%arg0: i32, %arg1: memref<4x16x16xf32, #tpu.memory_space<vmem>>, %arg2: memref<4x16x16xf32, #tpu.memory_space<vmem>>, %arg3: memref<4x20x20xf32, #tpu.memory_space<vmem>>) attributes {dimension_semantics = [#tpu.dimension_semantics<parallel>], iteration_bounds = array<i64: 2>, scalar_prefetch = 0 : i64, scratch_operands = 1 : i64, tpu.core_type = #tpu.core_type<tc>, window_params = [{transform_indices = @transform_0, window_bounds = array<i64: 4, 16, 16>}, {transform_indices = @transform_1, window_bounds = array<i64: 4, 16, 16>}]} {
    %cst = arith.constant 0.000000e+00 : f32
    %0 = vector.broadcast %cst : f32 to vector<4x2x20xf32>
    %c0 = arith.constant 0 : index
    %c0_0 = arith.constant 0 : index
    %c0_1 = arith.constant 0 : index
    %1 = vector.load %arg3[%c0, %c0_0, %c0_1] : memref<4x20x20xf32, #tpu.memory_space<vmem>>, vector<4x2x20xf32>
    tpu.vector_store %arg3[%c0, %c0_0, %c0_1], %0 {strides = array<i32>} : memref<4x20x20xf32, #tpu.memory_space<vmem>>, vector<4x2x20xf32>,
    %cst_2 = arith.constant 0.000000e+00 : f32
    %2 = vector.broadcast %cst_2 : f32 to vector<4x2x20xf32>
    %c0_3 = arith.constant 0 : index
    %c18 = arith.constant 18 : index
    %c0_4 = arith.constant 0 : index
    %3 = vector.load %arg3[%c0_3, %c18, %c0_4] : memref<4x20x20xf32, #tpu.memory_space<vmem>>, vector<4x2x20xf32>
    tpu.vector_store %arg3[%c0_3, %c18, %c0_4], %2 {strides = array<i32>} : memref<4x20x20xf32, #tpu.memory_space<vmem>>, vector<4x2x20xf32>,
    %cst_5 = arith.constant 0.000000e+00 : f32
    %4 = vector.broadcast %cst_5 : f32 to vector<4x20x2xf32>
    %c0_6 = arith.constant 0 : index
    %c0_7 = arith.constant 0 : index
    %c0_8 = arith.constant 0 : index
    %5 = vector.load %arg3[%c0_6, %c0_7, %c0_8] : memref<4x20x20xf32, #tpu.memory_space<vmem>>, vector<4x20x2xf32>
    tpu.vector_store %arg3[%c0_6, %c0_7, %c0_8], %4 {strides = array<i32>} : memref<4x20x20xf32, #tpu.memory_space<vmem>>, vector<4x20x2xf32>,
    %cst_9 = arith.constant 0.000000e+00 : f32
    %6 = vector.broadcast %cst_9 : f32 to vector<4x20x2xf32>
    %c0_10 = arith.constant 0 : index
    %c0_11 = arith.constant 0 : index
    %c18_12 = arith.constant 18 : index
    %7 = vector.load %arg3[%c0_10, %c0_11, %c18_12] : memref<4x20x20xf32, #tpu.memory_space<vmem>>, vector<4x20x2xf32>
    tpu.vector_store %arg3[%c0_10, %c0_11, %c18_12], %6 {strides = array<i32>} : memref<4x20x20xf32, #tpu.memory_space<vmem>>, vector<4x20x2xf32>,
    %c0_13 = arith.constant 0 : index
    %c0_14 = arith.constant 0 : index
    %c0_15 = arith.constant 0 : index
    %8 = vector.load %arg1[%c0_13, %c0_14, %c0_15] : memref<4x16x16xf32, #tpu.memory_space<vmem>>, vector<4x16x16xf32>
    %c0_16 = arith.constant 0 : index
    %c2 = arith.constant 2 : index
    %c2_17 = arith.constant 2 : index
    %9 = vector.load %arg3[%c0_16, %c2, %c2_17] : memref<4x20x20xf32, #tpu.memory_space<vmem>>, vector<4x16x16xf32>
    tpu.vector_store %arg3[%c0_16, %c2, %c2_17], %8 {strides = array<i32>} : memref<4x20x20xf32, #tpu.memory_space<vmem>>, vector<4x16x16xf32>,
    %c0_18 = arith.constant 0 : index
    %c0_19 = arith.constant 0 : index
    %c0_20 = arith.constant 0 : index
    %10 = vector.load %arg3[%c0_18, %c0_19, %c0_20] : memref<4x20x20xf32, #tpu.memory_space<vmem>>, vector<4x20x20xf32>
    %11 = vector.extract_strided_slice %10 {offsets = [0, 0, 0], sizes = [4, 20, 16], strides = [1, 1, 1]} : vector<4x20x20xf32> to vector<4x20x16xf32>
    %12 = vector.extract_strided_slice %10 {offsets = [0, 0, 1], sizes = [4, 20, 16], strides = [1, 1, 1]} : vector<4x20x20xf32> to vector<4x20x16xf32>
    %13 = arith.addf %11, %12 : vector<4x20x16xf32>
    %14 = vector.extract_strided_slice %10 {offsets = [0, 0, 2], sizes = [4, 20, 16], strides = [1, 1, 1]} : vector<4x20x20xf32> to vector<4x20x16xf32>
    %15 = vector.extract_strided_slice %10 {offsets = [0, 0, 3], sizes = [4, 20, 16], strides = [1, 1, 1]} : vector<4x20x20xf32> to vector<4x20x16xf32>
    %16 = arith.addf %14, %15 : vector<4x20x16xf32>
    %17 = arith.addf %13, %16 : vector<4x20x16xf32>
    %18 = vector.extract_strided_slice %10 {offsets = [0, 0, 4], sizes = [4, 20, 16], strides = [1, 1, 1]} : vector<4x20x20xf32> to vector<4x20x16xf32>
    %19 = arith.addf %17, %18 : vector<4x20x16xf32>
    %20 = vector.extract_strided_slice %19 {offsets = [0, 0, 0], sizes = [4, 16, 16], strides = [1, 1, 1]} : vector<4x20x16xf32> to vector<4x16x16xf32>
    %21 = vector.extract_strided_slice %19 {offsets = [0, 1, 0], sizes = [4, 16, 16], strides = [1, 1, 1]} : vector<4x20x16xf32> to vector<4x16x16xf32>
    %22 = arith.addf %20, %21 : vector<4x16x16xf32>
    %23 = vector.extract_strided_slice %19 {offsets = [0, 2, 0], sizes = [4, 16, 16], strides = [1, 1, 1]} : vector<4x20x16xf32> to vector<4x16x16xf32>
    %24 = vector.extract_strided_slice %19 {offsets = [0, 3, 0], sizes = [4, 16, 16], strides = [1, 1, 1]} : vector<4x20x16xf32> to vector<4x16x16xf32>
    %25 = arith.addf %23, %24 : vector<4x16x16xf32>
    %26 = arith.addf %22, %25 : vector<4x16x16xf32>
    %27 = vector.extract_strided_slice %19 {offsets = [0, 4, 0], sizes = [4, 16, 16], strides = [1, 1, 1]} : vector<4x20x16xf32> to vector<4x16x16xf32>
    %28 = arith.addf %26, %27 : vector<4x16x16xf32>
    %cst_21 = arith.constant 4.000000e-02 : f32
    %29 = vector.broadcast %cst_21 : f32 to vector<4x16x16xf32>
    %30 = arith.mulf %28, %29 : vector<4x16x16xf32>
    %31 = arith.subf %8, %30 : vector<4x16x16xf32>
    %cst_22 = arith.constant 5.000000e-01 : f32
    %32 = vector.broadcast %cst_22 : f32 to vector<4x16x16xf32>
    %33 = arith.mulf %32, %31 : vector<4x16x16xf32>
    %cst_23 = arith.constant 5.000000e-01 : f32
    %34 = vector.broadcast %cst_23 : f32 to vector<4x16x16xf32>
    %35 = arith.addf %34, %33 : vector<4x16x16xf32>
    %c0_24 = arith.constant 0 : index
    %c0_25 = arith.constant 0 : index
    %c0_26 = arith.constant 0 : index
    %36 = vector.load %arg2[%c0_24, %c0_25, %c0_26] : memref<4x16x16xf32, #tpu.memory_space<vmem>>, vector<4x16x16xf32>
    tpu.vector_store %arg2[%c0_24, %c0_25, %c0_26], %35 {strides = array<i32>} : memref<4x16x16xf32, #tpu.memory_space<vmem>>, vector<4x16x16xf32>,
    return
  }
  func.func @transform_0(%arg0: i32) -> (i32, i32, i32) {
    %c0_i32 = arith.constant 0 : i32
    %c0_i32_0 = arith.constant 0 : i32
    %c0_i32_1 = arith.constant 0 : i32
    return %arg0, %c0_i32, %c0_i32_0 : i32, i32, i32
  }
  func.func @transform_1(%arg0: i32) -> (i32, i32, i32) {
    %c0_i32 = arith.constant 0 : i32
    %c0_i32_0 = arith.constant 0 : i32
    %c0_i32_1 = arith.constant 0 : i32
    return %arg0, %c0_i32, %c0_i32_0 : i32, i32, i32
  }
}

</mosaic_0001>

<llo_original>
// kernel: tpu_custom_call.1
$region0: #{tpu_custom_call.1}
  #allocation0 [shape = 'u32[]', space=smem, size = 0x4, offset = 0x4, fixed_abs, tag = 'smem constant byte address 0x4 - core index']
  #allocation1 [shape = 'u32[144,128]{1,0:T(1,128)}', space=vmem, size = 0x12000, scoped, tag = 'internal scratch']
  #allocation2 [shape = 'f32[4,20,20]{2,1,0:T(8,128)}', space=vmem, size = 0xc000, scoped, tag = 'scratch operand']
  %s0 = inlined_call_operand.hbm [shape: f32[8,16,16], index: 0, kind: input, shape index: {}]
  %s1 = inlined_call_operand.hbm [shape: f32[8,16,16], index: 1, kind: output, shape index: {}]
  %s2 = sld [smem:[#allocation0]]
  $region41: #{tpu_custom_call.1} parent=0
    _
  %s4 = ssub.s32 1, %s2
  %s5 = scalar_select 0, %s4, %s2
  $region1: #{tpu_custom_call.1} parent=0
    #allocation3 [shape = 'u8[65536]{0}', space=vmem, size = 0x10000, scoped, tag = 'input window, operand 0']
    #allocation4 [shape = 's32[2]{0}', space=sflag, size = 0x8, scoped, tag = 'scoped memory for tpu_custom_call.1']
    #allocation5 [shape = 's32[2]{0}', space=sflag, size = 0x8, scoped, tag = 'scoped memory for tpu_custom_call.1']
    #allocation6 [shape = 'u8[65536]{0}', space=vmem, size = 0x10000, scoped, tag = 'output window, operand 0']
    %6 = vsyncpa [#allocation4], 0
    %s7 = scalar_lea.sflag [#allocation4], 1
    %8 = vsyncpa %s7, 0
    %9 = vsyncpa [#allocation5], 0
    %s10 = scalar_lea.sflag [#allocation5], 1
    %11 = vsyncpa %s10, 0
    loop: start=0, step=1, limit=4
    $region2: #{tpu_custom_call.1} parent=1 // loop_pre_header
      _
    $region3: #{tpu_custom_call.1} parent=1 // loop_header
      %s13 = sphi 0, %s17
      %p14 = scmp.ge.s32.totalorder %s13, 4
      %s23 = sphi 0, %s25
      %s26 = sphi 0, %s23
      %s27 = sphi 0, %s26
      %s43 = sphi 0, %s27
      %s49 = sphi 0, %s51
      %s52 = sphi 0, %s49
      %s53 = sphi 0, %s52
      %s69 = sphi 0, %s53
    $region4: #{tpu_custom_call.1} parent=1 // loop_header_branch
      %16 = sbr.rel (%p14) target = $region8
    $region5: #{tpu_custom_call.1} parent=1 // loop_body
      %s18 = ssub.s32 %s13, 1
      %s19 = ssub.s32 %s13, 2
      %s20 = sadd.s32 %s13, 1
      %s21 = ssub.s32 %s13, %s20
      %p22 = scmp.eq.s32.totalorder %s21, 0
      %s24 = sadd.s32 %s23, 1
      %s25 = scalar_select %p22, %s23, %s24
      %p28 = pneg %p22
      %p29 = scmp.eq.s32.totalorder %s13, 1
      %p30 = por %p28, %p29
      %p31 = scmp.ne.s32.totalorder %s23, %s26
      %p32 = scmp.eq.s32.totalorder %s13, 0
      %p33 = por %p31, %p32
      %p34 = scmp.ne.s32.totalorder %s23, %s26
      %p35 = scmp.eq.s32.totalorder %s18, 1
      %p36 = por %p34, %p35
      %p37 = scmp.ne.s32.totalorder %s26, %s27
      %p38 = scmp.eq.s32.totalorder %s18, 0
      %p39 = por %p37, %p38
      %p40 = scmp.ne.s32.totalorder %s26, %s27
      %p41 = scmp.eq.s32.totalorder %s19, 1
      %p42 = por %p40, %p41
      %p44 = scmp.ne.s32.totalorder %s27, %s43
      %p45 = scmp.eq.s32.totalorder %s19, 0
      %p46 = por %p44, %p45
      %s47 = ssub.s32 %s13, %s20
      %p48 = scmp.eq.s32.totalorder %s47, 0
      %s50 = sadd.s32 %s49, 1
      %s51 = scalar_select %p48, %s49, %s50
      %p54 = pneg %p48
      %p55 = scmp.eq.s32.totalorder %s13, 1
      %p56 = por %p54, %p55
      %p57 = scmp.ne.s32.totalorder %s49, %s52
      %p58 = scmp.eq.s32.totalorder %s13, 0
      %p59 = por %p57, %p58
      %p60 = scmp.ne.s32.totalorder %s49, %s52
      %p61 = scmp.eq.s32.totalorder %s18, 1
      %p62 = por %p60, %p61
      %p63 = scmp.ne.s32.totalorder %s52, %s53
      %p64 = scmp.eq.s32.totalorder %s18, 0
      %p65 = por %p63, %p64
      %p66 = scmp.ne.s32.totalorder %s52, %s53
      %p67 = scmp.eq.s32.totalorder %s19, 1
      %p68 = por %p66, %p67
      %p70 = scmp.ne.s32.totalorder %s53, %s69
      %p71 = scmp.eq.s32.totalorder %s19, 0
      %p72 = por %p70, %p71
      %p73 = scmp.le.s32.totalorder 1, %s13
      %p74 = scmp.lt.s32.totalorder %s13, 3
      %p75 = pnand %p73, %p74
      %p76 = pneg %p75
      // Predicated region
      $region9: #{tpu_custom_call.1} parent=5 // pred_check
        _
      $region10: #{tpu_custom_call.1} parent=5 // pred_check_branch
        %78 = sbr.rel (%p75) target = $region12
      $region11: #{tpu_custom_call.1} parent=5 // pred_region
        %s79 = ssub.s32 %s13, 1
      $region12: #{tpu_custom_call.1} parent=5 // pred_fallthru
        _
      %p80 = scmp.lt.s32.totalorder %s13, 2
      // Predicated region
      $region13: #{tpu_custom_call.1} parent=5 // pred_check
        %p81 = pneg %p80
      $region14: #{tpu_custom_call.1} parent=5 // pred_check_branch
        %83 = sbr.rel (%p81) target = $region16
      $region15: #{tpu_custom_call.1} parent=5 // pred_region
        // Predicated region
        $region17: #{tpu_custom_call.1} parent=15 // pred_check
          %p84 = pneg %p33
        $region18: #{tpu_custom_call.1} parent=15 // pred_check_branch
          %86 = sbr.rel (%p84) target = $region20
        $region19: #{tpu_custom_call.1} parent=15 // pred_region
          %s87 = sand.u32 %s23, 1
          %s88 = scalar_lea.sflag [#allocation4], %s87
          %s89 = sand.u32 %s23, 1
          %s90 = smul.addr %s89, 64
          %s91 = scalar_lea.vmem [#allocation3], %s90
          %s92 = smul.u32 4, %s13
          %s94 = ssub.s32 1024, 1024
          %95 = vsyncadd %s88, %s94
          %s96 = smul.addr %s92, 2
          %s97 = smul.addr %s96, 128
          %s98 = scalar_lea.hbm %s0, %s97
          %s99 = sshll.u32 %s91, 4
          %s100 = int_to_ptr.vmem [resolvable:$true] %s99
          %105 = dma.hbm_to_vmem [thread:$0]  %s98, 1024, %s100, %s88, 128, 128, 8
        $region20: #{tpu_custom_call.1} parent=15 // pred_fallthru
          _
      $region16: #{tpu_custom_call.1} parent=5 // pred_fallthru
        _
      %p106 = scmp.le.s32.totalorder 1, %s13
      %p107 = scmp.lt.s32.totalorder %s13, 3
      %p108 = pnand %p106, %p107
      %p109 = pneg %p108
      // Predicated region
      $region21: #{tpu_custom_call.1} parent=5 // pred_check
        _
      $region22: #{tpu_custom_call.1} parent=5 // pred_check_branch
        %111 = sbr.rel (%p108) target = $region24
      $region23: #{tpu_custom_call.1} parent=5 // pred_region
        %s112 = ssub.s32 %s13, 1
        %s113 = sand.u32 %s26, 1
        %s114 = scalar_lea.sflag [#allocation4], %s113
        %s115 = sand.u32 %s26, 1
        %s116 = smul.addr %s115, 64
        %s117 = scalar_lea.vmem [#allocation3], %s116
        // Predicated region
        $region25: #{tpu_custom_call.1} parent=23 // pred_check
          %p118 = pneg %p39
        $region26: #{tpu_custom_call.1} parent=23 // pred_check_branch
          %120 = sbr.rel (%p118) target = $region28
        $region27: #{tpu_custom_call.1} parent=23 // pred_region
          %121 = dma.done %s114, 1024
        $region28: #{tpu_custom_call.1} parent=23 // pred_fallthru
          _
        %s122 = sand.u32 %s26, 1
        %s123 = scalar_lea.sflag [#allocation4], %s122
        %s124 = sand.u32 %s26, 1
        %s125 = smul.addr %s124, 64
        %s126 = scalar_lea.vmem [#allocation3], %s125
        %p127 = pneg %p39
        %p128 = pneg %p36
        %p129 = pneg %p65
        %p130 = pneg %p62
        %s131 = sand.u32 %s52, 1
        %s132 = scalar_lea.sflag [#allocation5], %s131
        %s133 = sand.u32 %s52, 1
        %s134 = smul.addr %s133, 64
        %s135 = scalar_lea.vmem [#allocation6], %s134
        %s136 = smul.u32 4, %s18
        %s137 = smul.u32 4, %s18
        %vm138 = vcmask 156672
        %139 = vst.msk [vmem:[#allocation2] sm:$0x3] %vm138, 0.0
        %140 = vst.msk [vmem:[#allocation2 + $0x18] sm:$0x3] %vm138, 0.0
        %141 = vst.msk [vmem:[#allocation2 + $0x30] sm:$0x3] %vm138, 0.0
        %142 = vst.msk [vmem:[#allocation2 + $0x48] sm:$0x3] %vm138, 0.0
        %143 = vst.msk [vmem:[#allocation2 + $0x12] sm:$0x3] %vm138, 0.0
        %144 = vst.msk [vmem:[#allocation2 + $0x2a] sm:$0x3] %vm138, 0.0
        %145 = vst.msk [vmem:[#allocation2 + $0x42] sm:$0x3] %vm138, 0.0
        %146 = vst.msk [vmem:[#allocation2 + $0x5a] sm:$0x3] %vm138, 0.0
        %vm147 = vcmask 15360
        %148 = vst.msk [vmem:[#allocation2] sm:$0xff] %vm147, 0.0
        %149 = vst.msk [vmem:[#allocation2 + $0x8] sm:$0xff] %vm147, 0.0
        %vm150 = vcmask 11264
        %151 = vst.msk [vmem:[#allocation2 + $0x10] sm:$0xf] %vm150, 0.0
        %152 = vst.msk [vmem:[#allocation2 + $0x18] sm:$0xff] %vm147, 0.0
        %153 = vst.msk [vmem:[#allocation2 + $0x20] sm:$0xff] %vm147, 0.0
        %154 = vst.msk [vmem:[#allocation2 + $0x28] sm:$0xf] %vm150, 0.0
        %155 = vst.msk [vmem:[#allocation2 + $0x30] sm:$0xff] %vm147, 0.0
        %156 = vst.msk [vmem:[#allocation2 + $0x38] sm:$0xff] %vm147, 0.0
        %157 = vst.msk [vmem:[#allocation2 + $0x40] sm:$0xf] %vm150, 0.0
        %158 = vst.msk [vmem:[#allocation2 + $0x48] sm:$0xff] %vm147, 0.0
        %159 = vst.msk [vmem:[#allocation2 + $0x50] sm:$0xff] %vm147, 0.0
        %160 = vst.msk [vmem:[#allocation2 + $0x58] sm:$0xf] %vm150, 0.0
        %vm161 = vcmask 162960
        %162 = vst.msk [vmem:[#allocation2] sm:$0xff] %vm161, 0.0
        %163 = vst.msk [vmem:[#allocation2 + $0x8] sm:$0xff] %vm161, 0.0
        %vm164 = vcmask 158864
        %165 = vst.msk [vmem:[#allocation2 + $0x10] sm:$0xf] %vm164, 0.0
        %166 = vst.msk [vmem:[#allocation2 + $0x18] sm:$0xff] %vm161, 0.0
        %167 = vst.msk [vmem:[#allocation2 + $0x20] sm:$0xff] %vm161, 0.0
        %168 = vst.msk [vmem:[#allocation2 + $0x28] sm:$0xf] %vm164, 0.0
        %169 = vst.msk [vmem:[#allocation2 + $0x30] sm:$0xff] %vm161, 0.0
        %170 = vst.msk [vmem:[#allocation2 + $0x38] sm:$0xff] %vm161, 0.0
        %171 = vst.msk [vmem:[#allocation2 + $0x40] sm:$0xf] %vm164, 0.0
        %172 = vst.msk [vmem:[#allocation2 + $0x48] sm:$0xff] %vm161, 0.0
        %173 = vst.msk [vmem:[#allocation2 + $0x50] sm:$0xff] %vm161, 0.0
        %174 = vst.msk [vmem:[#allocation2 + $0x58] sm:$0xf] %vm164, 0.0
        %v175 = vld [vmem:[%s117] sm:$0xff]
        %v176 = vld [vmem:[%s117 + $0x8] sm:$0xff]
        %v177 = vld [vmem:[%s117 + $0x10] sm:$0xff]
        %v178 = vld [vmem:[%s117 + $0x18] sm:$0xff]
        %v179 = vld [vmem:[%s117 + $0x20] sm:$0xff]
        %v180 = vld [vmem:[%s117 + $0x28] sm:$0xff]
        %v181 = vld [vmem:[%s117 + $0x30] sm:$0xff]
        %v182 = vld [vmem:[%s117 + $0x38] sm:$0xff]
        %191 = vrot.lane.b32.xlu0 %v175, 2
        %v192 = vpop.permute.xlu0 %191
        %193 = vrot.lane.b32.xlu0 %v176, 2
        %v194 = vpop.permute.xlu0 %193
        %195 = vrot.lane.b32.xlu0 %v177, 2
        %v196 = vpop.permute.xlu0 %195
        %197 = vrot.lane.b32.xlu0 %v178, 2
        %v198 = vpop.permute.xlu0 %197
        %199 = vrot.lane.b32.xlu0 %v179, 2
        %v200 = vpop.permute.xlu0 %199
        %201 = vrot.lane.b32.xlu0 %v180, 2
        %v202 = vpop.permute.xlu0 %201
        %203 = vrot.lane.b32.xlu0 %v181, 2
        %v204 = vpop.permute.xlu0 %203
        %205 = vrot.lane.b32.xlu0 %v182, 2
        %v206 = vpop.permute.xlu0 %205
        %vm215 = vcmask 146448
        %216 = vst.msk [vmem:[#allocation2 + $0x2] sm:$0xff] %vm215, %v192
        %217 = vst.msk [vmem:[#allocation2 + $0xa] sm:$0xff] %vm215, %v194
        %218 = vst.msk [vmem:[#allocation2 + $0x1a] sm:$0xff] %vm215, %v196
        %219 = vst.msk [vmem:[#allocation2 + $0x22] sm:$0xff] %vm215, %v198
        %220 = vst.msk [vmem:[#allocation2 + $0x32] sm:$0xff] %vm215, %v200
        %221 = vst.msk [vmem:[#allocation2 + $0x3a] sm:$0xff] %vm215, %v202
        %222 = vst.msk [vmem:[#allocation2 + $0x4a] sm:$0xff] %vm215, %v204
        %223 = vst.msk [vmem:[#allocation2 + $0x52] sm:$0xff] %vm215, %v206
        %v224 = vld [vmem:[#allocation2] sm:$0xff]
        %v225 = vld [vmem:[#allocation2 + $0x8] sm:$0xff]
        %v226 = vld [vmem:[#allocation2 + $0x10] sm:$0xf]
        %v227 = vld [vmem:[#allocation2 + $0x18] sm:$0xff]
        %v228 = vld [vmem:[#allocation2 + $0x20] sm:$0xff]
        %v229 = vld [vmem:[#allocation2 + $0x28] sm:$0xf]
        %v230 = vld [vmem:[#allocation2 + $0x30] sm:$0xff]
        %v231 = vld [vmem:[#allocation2 + $0x38] sm:$0xff]
        %v232 = vld [vmem:[#allocation2 + $0x40] sm:$0xf]
        %v233 = vld [vmem:[#allocation2 + $0x48] sm:$0xff]
        %v234 = vld [vmem:[#allocation2 + $0x50] sm:$0xff]
        %v235 = vld [vmem:[#allocation2 + $0x58] sm:$0xf]
        %248 = vrot.lane.b32.xlu0 %v224, 127
        %v249 = vpop.permute.xlu0 %248
        %250 = vrot.lane.b32.xlu0 %v225, 127
        %v251 = vpop.permute.xlu0 %250
        %252 = vrot.lane.b32.xlu0 %v226, 127
        %v253 = vpop.permute.xlu0 %252
        %254 = vrot.lane.b32.xlu0 %v227, 127
        %v255 = vpop.permute.xlu0 %254
        %256 = vrot.lane.b32.xlu0 %v228, 127
        %v257 = vpop.permute.xlu0 %256
        %258 = vrot.lane.b32.xlu0 %v229, 127
        %v259 = vpop.permute.xlu0 %258
        %260 = vrot.lane.b32.xlu0 %v230, 127
        %v261 = vpop.permute.xlu0 %260
        %262 = vrot.lane.b32.xlu0 %v231, 127
        %v263 = vpop.permute.xlu0 %262
        %264 = vrot.lane.b32.xlu0 %v232, 127
        %v265 = vpop.permute.xlu0 %264
        %266 = vrot.lane.b32.xlu0 %v233, 127
        %v267 = vpop.permute.xlu0 %266
        %268 = vrot.lane.b32.xlu0 %v234, 127
        %v269 = vpop.permute.xlu0 %268
        %270 = vrot.lane.b32.xlu0 %v235, 127
        %v271 = vpop.permute.xlu0 %270
        %v284 = vadd.f32 %v224, %v249
        %v285 = vadd.f32 %v225, %v251
        %v286 = vadd.f32 %v226, %v253
        %v287 = vadd.f32 %v227, %v255
        %v288 = vadd.f32 %v228, %v257
        %v289 = vadd.f32 %v229, %v259
        %v290 = vadd.f32 %v230, %v261
        %v291 = vadd.f32 %v231, %v263
        %v292 = vadd.f32 %v232, %v265
        %v293 = vadd.f32 %v233, %v267
        %v294 = vadd.f32 %v234, %v269
        %v295 = vadd.f32 %v235, %v271
        %308 = vrot.lane.b32.xlu0 %v284, 126
        %v309 = vpop.permute.xlu0 %308
        %310 = vrot.lane.b32.xlu0 %v285, 126
        %v311 = vpop.permute.xlu0 %310
        %312 = vrot.lane.b32.xlu0 %v286, 126
        %v313 = vpop.permute.xlu0 %312
        %314 = vrot.lane.b32.xlu0 %v287, 126
        %v315 = vpop.permute.xlu0 %314
        %316 = vrot.lane.b32.xlu0 %v288, 126
        %v317 = vpop.permute.xlu0 %316
        %318 = vrot.lane.b32.xlu0 %v289, 126
        %v319 = vpop.permute.xlu0 %318
        %320 = vrot.lane.b32.xlu0 %v290, 126
        %v321 = vpop.permute.xlu0 %320
        %322 = vrot.lane.b32.xlu0 %v291, 126
        %v323 = vpop.permute.xlu0 %322
        %324 = vrot.lane.b32.xlu0 %v292, 126
        %v325 = vpop.permute.xlu0 %324
        %326 = vrot.lane.b32.xlu0 %v293, 126
        %v327 = vpop.permute.xlu0 %326
        %328 = vrot.lane.b32.xlu0 %v294, 126
        %v329 = vpop.permute.xlu0 %328
        %330 = vrot.lane.b32.xlu0 %v295, 126
        %v331 = vpop.permute.xlu0 %330
        %v344 = vadd.f32 %v284, %v309
        %v345 = vadd.f32 %v285, %v311
        %v346 = vadd.f32 %v286, %v313
        %v347 = vadd.f32 %v287, %v315
        %v348 = vadd.f32 %v288, %v317
        %v349 = vadd.f32 %v289, %v319
        %v350 = vadd.f32 %v290, %v321
        %v351 = vadd.f32 %v291, %v323
        %v352 = vadd.f32 %v292, %v325
        %v353 = vadd.f32 %v293, %v327
        %v354 = vadd.f32 %v294, %v329
        %v355 = vadd.f32 %v295, %v331
        %356 = vrot.lane.b32.xlu0 %v224, 124
        %v357 = vpop.permute.xlu0 %356
        %358 = vrot.lane.b32.xlu0 %v225, 124
        %v359 = vpop.permute.xlu0 %358
        %360 = vrot.lane.b32.xlu0 %v226, 124
        %v361 = vpop.permute.xlu0 %360
        %362 = vrot.lane.b32.xlu0 %v227, 124
        %v363 = vpop.permute.xlu0 %362
        %364 = vrot.lane.b32.xlu0 %v228, 124
        %v365 = vpop.permute.xlu0 %364
        %366 = vrot.lane.b32.xlu0 %v229, 124
        %v367 = vpop.permute.xlu0 %366
        %368 = vrot.lane.b32.xlu0 %v230, 124
        %v369 = vpop.permute.xlu0 %368
        %370 = vrot.lane.b32.xlu0 %v231, 124
        %v371 = vpop.permute.xlu0 %370
        %372 = vrot.lane.b32.xlu0 %v232, 124
        %v373 = vpop.permute.xlu0 %372
        %374 = vrot.lane.b32.xlu0 %v233, 124
        %v375 = vpop.permute.xlu0 %374
        %376 = vrot.lane.b32.xlu0 %v234, 124
        %v377 = vpop.permute.xlu0 %376
        %378 = vrot.lane.b32.xlu0 %v235, 124
        %v379 = vpop.permute.xlu0 %378
        %v392 = vadd.f32 %v344, %v357
        %v393 = vadd.f32 %v345, %v359
        %v394 = vadd.f32 %v346, %v361
        %v395 = vadd.f32 %v347, %v363
        %v396 = vadd.f32 %v348, %v365
        %v397 = vadd.f32 %v349, %v367
        %v398 = vadd.f32 %v350, %v369
        %v399 = vadd.f32 %v351, %v371
        %v400 = vadd.f32 %v352, %v373
        %v401 = vadd.f32 %v353, %v375
        %v402 = vadd.f32 %v354, %v377
        %v403 = vadd.f32 %v355, %v379
        %vm416 = vcmask 1046528
        %v417 = vrot.slane %v392, 1
        %v418 = vrot.slane %v393, 1
        %v419 = vsel %vm416, %v417, %v418
        %v420 = vrot.slane %v394, 1
        %v421 = vsel %vm416, %v418, %v420
        %v422 = vrot.slane %v395, 1
        %v423 = vrot.slane %v396, 1
        %v424 = vsel %vm416, %v422, %v423
        %v425 = vrot.slane %v397, 1
        %v426 = vsel %vm416, %v423, %v425
        %v427 = vrot.slane %v398, 1
        %v428 = vrot.slane %v399, 1
        %v429 = vsel %vm416, %v427, %v428
        %v430 = vrot.slane %v400, 1
        %v431 = vsel %vm416, %v428, %v430
        %v432 = vrot.slane %v401, 1
        %v433 = vrot.slane %v402, 1
        %v434 = vsel %vm416, %v432, %v433
        %v435 = vrot.slane %v403, 1
        %v436 = vsel %vm416, %v433, %v435
        %v445 = vadd.f32 %v392, %v419
        %v446 = vadd.f32 %v393, %v421
        %v447 = vadd.f32 %v395, %v424
        %v448 = vadd.f32 %v396, %v426
        %v449 = vadd.f32 %v398, %v429
        %v450 = vadd.f32 %v399, %v431
        %v451 = vadd.f32 %v401, %v434
        %v452 = vadd.f32 %v402, %v436
        %v457 = vadd.f32 %v394, %v420
        %v458 = vadd.f32 %v397, %v425
        %v459 = vadd.f32 %v400, %v430
        %v460 = vadd.f32 %v403, %v435
        %vm473 = vcmask 1045504
        %v474 = vrot.slane %v445, 2
        %v475 = vrot.slane %v446, 2
        %v476 = vsel %vm473, %v474, %v475
        %v477 = vrot.slane %v457, 2
        %v478 = vsel %vm473, %v475, %v477
        %v479 = vrot.slane %v447, 2
        %v480 = vrot.slane %v448, 2
        %v481 = vsel %vm473, %v479, %v480
        %v482 = vrot.slane %v458, 2
        %v483 = vsel %vm473, %v480, %v482
        %v484 = vrot.slane %v449, 2
        %v485 = vrot.slane %v450, 2
        %v486 = vsel %vm473, %v484, %v485
        %v487 = vrot.slane %v459, 2
        %v488 = vsel %vm473, %v485, %v487
        %v489 = vrot.slane %v451, 2
        %v490 = vrot.slane %v452, 2
        %v491 = vsel %vm473, %v489, %v490
        %v492 = vrot.slane %v460, 2
        %v493 = vsel %vm473, %v490, %v492
        %v502 = vadd.f32 %v445, %v476
        %v503 = vadd.f32 %v446, %v478
        %v504 = vadd.f32 %v447, %v481
        %v505 = vadd.f32 %v448, %v483
        %v506 = vadd.f32 %v449, %v486
        %v507 = vadd.f32 %v450, %v488
        %v508 = vadd.f32 %v451, %v491
        %v509 = vadd.f32 %v452, %v493
        %vm510 = vcmask 1043456
        %v511 = vrot.slane %v392, 4
        %v512 = vrot.slane %v393, 4
        %v513 = vsel %vm510, %v511, %v512
        %v514 = vrot.slane %v394, 4
        %v515 = vsel %vm510, %v512, %v514
        %v516 = vrot.slane %v395, 4
        %v517 = vrot.slane %v396, 4
        %v518 = vsel %vm510, %v516, %v517
        %v519 = vrot.slane %v397, 4
        %v520 = vsel %vm510, %v517, %v519
        %v521 = vrot.slane %v398, 4
        %v522 = vrot.slane %v399, 4
        %v523 = vsel %vm510, %v521, %v522
        %v524 = vrot.slane %v400, 4
        %v525 = vsel %vm510, %v522, %v524
        %v526 = vrot.slane %v401, 4
        %v527 = vrot.slane %v402, 4
        %v528 = vsel %vm510, %v526, %v527
        %v529 = vrot.slane %v403, 4
        %v530 = vsel %vm510, %v527, %v529
        %v539 = vadd.f32 %v502, %v513
        %v540 = vadd.f32 %v503, %v515
        %v541 = vadd.f32 %v504, %v518
        %v542 = vadd.f32 %v505, %v520
        %v543 = vadd.f32 %v506, %v523
        %v544 = vadd.f32 %v507, %v525
        %v545 = vadd.f32 %v508, %v528
        %v546 = vadd.f32 %v509, %v530
        %v547 = vmul.f32 %v539, 0.04
        %v548 = vmul.f32 %v540, 0.04
        %v549 = vmul.f32 %v541, 0.04
        %v550 = vmul.f32 %v542, 0.04
        %v551 = vmul.f32 %v543, 0.04
        %v552 = vmul.f32 %v544, 0.04
        %v553 = vmul.f32 %v545, 0.04
        %v554 = vmul.f32 %v546, 0.04
        %v555 = vsub.f32 %v175, %v547
        %v556 = vsub.f32 %v176, %v548
        %v557 = vsub.f32 %v177, %v549
        %v558 = vsub.f32 %v178, %v550
        %v559 = vsub.f32 %v179, %v551
        %v560 = vsub.f32 %v180, %v552
        %v561 = vsub.f32 %v181, %v553
        %v562 = vsub.f32 %v182, %v554
        %v563 = vmul.f32 %v555, 0.5
        %v564 = vmul.f32 %v556, 0.5
        %v565 = vmul.f32 %v557, 0.5
        %v566 = vmul.f32 %v558, 0.5
        %v567 = vmul.f32 %v559, 0.5
        %v568 = vmul.f32 %v560, 0.5
        %v569 = vmul.f32 %v561, 0.5
        %v570 = vmul.f32 %v562, 0.5
        %v571 = vadd.f32 %v563, 0.5
        %v572 = vadd.f32 %v564, 0.5
        %v573 = vadd.f32 %v565, 0.5
        %v574 = vadd.f32 %v566, 0.5
        %v575 = vadd.f32 %v567, 0.5
        %v576 = vadd.f32 %v568, 0.5
        %v577 = vadd.f32 %v569, 0.5
        %v578 = vadd.f32 %v570, 0.5
        %vm579 = vcmask 130048
        %580 = vst.msk [vmem:[%s135] sm:$0xff] %vm579, %v571
        %581 = vst.msk [vmem:[%s135 + $0x8] sm:$0xff] %vm579, %v572
        %582 = vst.msk [vmem:[%s135 + $0x10] sm:$0xff] %vm579, %v573
        %583 = vst.msk [vmem:[%s135 + $0x18] sm:$0xff] %vm579, %v574
        %584 = vst.msk [vmem:[%s135 + $0x20] sm:$0xff] %vm579, %v575
        %585 = vst.msk [vmem:[%s135 + $0x28] sm:$0xff] %vm579, %v576
        %586 = vst.msk [vmem:[%s135 + $0x30] sm:$0xff] %vm579, %v577
        %587 = vst.msk [vmem:[%s135 + $0x38] sm:$0xff] %vm579, %v578
        %s588 = sand.u32 %s52, 1
        %s589 = scalar_lea.sflag [#allocation5], %s588
        %s590 = sand.u32 %s52, 1
        %s591 = smul.addr %s590, 64
        %s592 = scalar_lea.vmem [#allocation6], %s591
        // Predicated region
        $region29: #{tpu_custom_call.1} parent=23 // pred_check
          %p593 = pneg %p62
        $region30: #{tpu_custom_call.1} parent=23 // pred_check_branch
          %595 = sbr.rel (%p593) target = $region32
        $region31: #{tpu_custom_call.1} parent=23 // pred_region
          %s596 = smul.u32 4, %s18
          %s598 = ssub.s32 1024, 1024
          %599 = vsyncadd %s589, %s598
          %s600 = smul.addr %s596, 2
          %s601 = smul.addr %s600, 128
          %s602 = scalar_lea.hbm %s1, %s601
          %s603 = sshll.u32 %s592, 4
          %s604 = int_to_ptr.vmem [resolvable:$true] %s603
          %609 = dma.vmem_to_hbm [thread:$0]  %s604, 1024, %s602, %s589, 128, 128, 8
        $region32: #{tpu_custom_call.1} parent=23 // pred_fallthru
          _
      $region24: #{tpu_custom_call.1} parent=5 // pred_fallthru
        _
      %p610 = scmp.le.s32.totalorder 2, %s13
      // Predicated region
      $region33: #{tpu_custom_call.1} parent=5 // pred_check
        %p611 = pneg %p610
      $region34: #{tpu_custom_call.1} parent=5 // pred_check_branch
        %613 = sbr.rel (%p611) target = $region36
      $region35: #{tpu_custom_call.1} parent=5 // pred_region
        %s614 = ssub.s32 %s13, 2
        // Predicated region
        $region37: #{tpu_custom_call.1} parent=35 // pred_check
          %p615 = pneg %p68
        $region38: #{tpu_custom_call.1} parent=35 // pred_check_branch
          %617 = sbr.rel (%p615) target = $region40
        $region39: #{tpu_custom_call.1} parent=35 // pred_region
          %s618 = sand.u32 %s53, 1
          %s619 = scalar_lea.sflag [#allocation5], %s618
          %s620 = sand.u32 %s53, 1
          %s621 = smul.addr %s620, 64
          %s622 = scalar_lea.vmem [#allocation6], %s621
          %623 = dma.done %s619, 1024
        $region40: #{tpu_custom_call.1} parent=35 // pred_fallthru
          _
      $region36: #{tpu_custom_call.1} parent=5 // pred_fallthru
        _
    $region6: #{tpu_custom_call.1} parent=1 // loop_footer
      %s17 = sadd.s32 1, %s13
    $region7: #{tpu_custom_call.1} parent=1 // loop_footer_branch
      %12 = sbr.rel target = $region3
    $region8: #{tpu_custom_call.1} parent=1 // loop_exit
      _
    %624 = vsyncpa [#allocation4], 1
    %s625 = scalar_lea.sflag [#allocation4], 1
    %626 = vsyncpa %s625, 1
    %627 = vsyncpa [#allocation5], 1
    %s628 = scalar_lea.sflag [#allocation5], 1
    %629 = vsyncpa %s628, 1

</llo_original>
